<compile_context>
chip_gen: v6e
topology: v6e:2x2x1
jax: 0.10.0
libtpu: 0.0.40
codegen_flags: <defaults>
</compile_context>

<pallas_src>
import jax
import jax.numpy as jnp
from jax.experimental import pallas as pl
from jax.experimental.pallas import tpu as pltpu

HIDDEN = 64
OUT = 2
OUT_PAD = 8  # pad fc3 output rows to the 8-sublane granularity


def simple_dnn_kernel(x_ref, w1_ref, b1_ref, w2_ref, b2_ref, w3_ref, b3_ref,
                      o_ref):
    # x: (1, TB) f32 -- batch on the lane axis.
    x = x_ref[...]

    # fc1 + relu as a VPU broadcast fma: (64, 1) * (1, TB) + (64, 1) -> (64, TB)
    h1 = jnp.maximum(w1_ref[...] * x + b1_ref[...], 0.0)

    # fc2 + relu on the MXU: (64, 64) @ (64, TB) -> (64, TB), lane-wide N.
    h2 = jnp.dot(w2_ref[...], h1, preferred_element_type=jnp.float32)
    h2 = jnp.maximum(h2 + b2_ref[...], 0.0)

    # fc3 (rows padded 2 -> 8): (8, 64) @ (64, TB) -> (8, TB)
    out = jnp.dot(w3_ref[...], h2, preferred_element_type=jnp.float32)
    o_ref[...] = (out + b3_ref[...]).astype(o_ref.dtype)


def _round_up(n, m):
    return ((n + m - 1) // m) * m


def simple_dnn_forward(x, w1, b1, w2, b2, w3, b3, *, tb=2048):
    """x: (B, 1) f32.  Weights in (in, out) convention.  Returns (B, 2) f32."""
    B = x.shape[0]
    # Lane-aligned batch tile; keep per-tile VMEM small (v7x has 64 MiB).
    TB = min(tb, _round_up(B, 128))
    Bp = _round_up(B, TB)

    # Transposed / padded operands (cheap wrapper-side layout plumbing).
    x_t = x.reshape(1, B)
    if Bp > B:
        x_t = jnp.pad(x_t, ((0, 0), (0, Bp - B)))

    w1c = w1.T                                    # (64, 1)
    b1c = b1.reshape(HIDDEN, 1)                   # (64, 1)
    w2t = w2.T                                    # (64, 64) = W2^T
    b2c = b2.reshape(HIDDEN, 1)                   # (64, 1)
    w3t = jnp.pad(w3.T, ((0, OUT_PAD - OUT), (0, 0)))            # (8, 64)
    b3c = jnp.pad(b3.reshape(OUT, 1), ((0, OUT_PAD - OUT), (0, 0)))  # (8, 1)

    const = lambda shape: pl.BlockSpec(shape, lambda i: (0,) * len(shape))

    out_t = pl.pallas_call(
        simple_dnn_kernel,
        out_shape=jax.ShapeDtypeStruct((OUT_PAD, Bp), jnp.float32),
        grid=(Bp // TB,),
        in_specs=[
            pl.BlockSpec((1, TB), lambda i: (0, i)),   # x  (1, Bp), batch-tiled
            const(w1c.shape),                          # (64, 1)
            const(b1c.shape),                          # (64, 1)
            const(w2t.shape),                          # (64, 64)
            const(b2c.shape),                          # (64, 1)
            const(w3t.shape),                          # (8, 64)
            const(b3c.shape),                          # (8, 1)
        ],
        out_specs=pl.BlockSpec((OUT_PAD, TB), lambda i: (0, i)),
        compiler_params=pltpu.CompilerParams(
            dimension_semantics=("parallel",)),
    )(x_t, w1c, b1c, w2t, b2c, w3t, b3c)

    # Drop padded rows / padded batch columns, back to (B, 2).
    return out_t[:OUT, :B].T


def init_params(key):
    """Deterministic init mimicking torch.nn.Linear's U(-1/sqrt(fan_in), ...).
    Weights are stored transposed: (in_features, out_features)."""
    ks = jax.random.split(key, 6)

    def unif(k, shape, fan_in):
        bound = 1.0 / jnp.sqrt(float(fan_in))
        return jax.random.uniform(k, shape, jnp.float32, -bound, bound)

    w1 = unif(ks[0], (1, HIDDEN), 1)
    b1 = unif(ks[1], (1, HIDDEN), 1)
    w2 = unif(ks[2], (HIDDEN, HIDDEN), HIDDEN)
    b2 = unif(ks[3], (1, HIDDEN), HIDDEN)
    w3 = unif(ks[4], (HIDDEN, OUT), HIDDEN)
    b3 = unif(ks[5], (1, OUT), HIDDEN)
    return w1, b1, w2, b2, w3, b3


if __name__ == "__main__":
    key = jax.random.PRNGKey(0)
    k_x, k_p = jax.random.split(key)

    B = 8  # small batch for the self-test
    x = jax.random.uniform(k_x, (B, 1), jnp.float32, 0.0, 2.0 * jnp.pi)
    params = init_params(k_p)

    out = simple_dnn_forward(x, *params)
    out = jax.block_until_ready(out)

    # Reference check in plain JAX (original row-major formulation).
    w1, b1, w2, b2, w3, b3 = params
    h = jnp.maximum(x @ w1 + b1, 0.0)
    h = jnp.maximum(h @ w2 + b2, 0.0)
    ref = h @ w3 + b3
    assert out.shape == (B, OUT)
    assert jnp.allclose(out, ref, atol=1e-5, rtol=1e-5)

    print("KERNEL_OK")
</pallas_src>

<mosaic_0001>
module attributes {stable_mosaic.version = 11 : i64} {
  func.func @simple_dnn_kernel(%arg0: i32, %arg1: memref<1x128xf32, #tpu.memory_space<vmem>>, %arg2: memref<64x1xf32, #tpu.memory_space<vmem>>, %arg3: memref<64x1xf32, #tpu.memory_space<vmem>>, %arg4: memref<64x64xf32, #tpu.memory_space<vmem>>, %arg5: memref<64x1xf32, #tpu.memory_space<vmem>>, %arg6: memref<8x64xf32, #tpu.memory_space<vmem>>, %arg7: memref<8x1xf32, #tpu.memory_space<vmem>>, %arg8: memref<8x128xf32, #tpu.memory_space<vmem>>) attributes {dimension_semantics = [#tpu.dimension_semantics<parallel>], iteration_bounds = array<i64: 1>, scalar_prefetch = 0 : i64, scratch_operands = 0 : i64, tpu.core_type = #tpu.core_type<tc>, window_params = [{transform_indices = @transform_0, window_bounds = array<i64: 1, 128>}, {pipeline_mode = #tpu.pipeline_mode<synchronous>, transform_indices = @transform_1, window_bounds = array<i64: 64, 1>}, {pipeline_mode = #tpu.pipeline_mode<synchronous>, transform_indices = @transform_2, window_bounds = array<i64: 64, 1>}, {pipeline_mode = #tpu.pipeline_mode<synchronous>, transform_indices = @transform_3, window_bounds = array<i64: 64, 64>}, {pipeline_mode = #tpu.pipeline_mode<synchronous>, transform_indices = @transform_4, window_bounds = array<i64: 64, 1>}, {pipeline_mode = #tpu.pipeline_mode<synchronous>, transform_indices = @transform_5, window_bounds = array<i64: 8, 64>}, {pipeline_mode = #tpu.pipeline_mode<synchronous>, transform_indices = @transform_6, window_bounds = array<i64: 8, 1>}, {transform_indices = @transform_7, window_bounds = array<i64: 8, 128>}]} {
    %c0 = arith.constant 0 : index
    %c0_0 = arith.constant 0 : index
    %0 = vector.load %arg1[%c0, %c0_0] : memref<1x128xf32, #tpu.memory_space<vmem>>, vector<1x128xf32>
    %c0_1 = arith.constant 0 : index
    %c0_2 = arith.constant 0 : index
    %1 = vector.load %arg2[%c0_1, %c0_2] : memref<64x1xf32, #tpu.memory_space<vmem>>, vector<64x1xf32>
    %2 = vector.broadcast %1 : vector<64x1xf32> to vector<64x128xf32>
    %3 = vector.broadcast %0 : vector<1x128xf32> to vector<64x128xf32>
    %4 = arith.mulf %2, %3 : vector<64x128xf32>
    %c0_3 = arith.constant 0 : index
    %c0_4 = arith.constant 0 : index
    %5 = vector.load %arg3[%c0_3, %c0_4] : memref<64x1xf32, #tpu.memory_space<vmem>>, vector<64x1xf32>
    %6 = vector.broadcast %5 : vector<64x1xf32> to vector<64x128xf32>
    %7 = arith.addf %4, %6 : vector<64x128xf32>
    %cst = arith.constant 0.000000e+00 : f32
    %8 = vector.broadcast %cst : f32 to vector<64x128xf32>
    %9 = arith.maximumf %7, %8 : vector<64x128xf32>
    %c0_5 = arith.constant 0 : index
    %c0_6 = arith.constant 0 : index
    %10 = vector.load %arg4[%c0_5, %c0_6] : memref<64x64xf32, #tpu.memory_space<vmem>>, vector<64x64xf32>
    %cst_7 = arith.constant dense<0.000000e+00> : vector<64x128xf32>
    %11 = tpu.matmul %10, %9, %cst_7 {dimension_numbers = #tpu.dot_dimension_numbers<[1], [0], [0], [1], [0, 0, 1, 1], [], []>} : vector<64x64xf32>, vector<64x128xf32>, vector<64x128xf32> -> vector<64x128xf32>
    %c0_8 = arith.constant 0 : index
    %c0_9 = arith.constant 0 : index
    %12 = vector.load %arg5[%c0_8, %c0_9] : memref<64x1xf32, #tpu.memory_space<vmem>>, vector<64x1xf32>
    %13 = vector.broadcast %12 : vector<64x1xf32> to vector<64x128xf32>
    %14 = arith.addf %11, %13 : vector<64x128xf32>
    %cst_10 = arith.constant 0.000000e+00 : f32
    %15 = vector.broadcast %cst_10 : f32 to vector<64x128xf32>
    %16 = arith.maximumf %14, %15 : vector<64x128xf32>
    %c0_11 = arith.constant 0 : index
    %c0_12 = arith.constant 0 : index
    %17 = vector.load %arg6[%c0_11, %c0_12] : memref<8x64xf32, #tpu.memory_space<vmem>>, vector<8x64xf32>
    %cst_13 = arith.constant dense<0.000000e+00> : vector<8x128xf32>
    %18 = tpu.matmul %17, %16, %cst_13 {dimension_numbers = #tpu.dot_dimension_numbers<[1], [0], [0], [1], [0, 0, 1, 1], [], []>} : vector<8x64xf32>, vector<64x128xf32>, vector<8x128xf32> -> vector<8x128xf32>
    %c0_14 = arith.constant 0 : index
    %c0_15 = arith.constant 0 : index
    %19 = vector.load %arg7[%c0_14, %c0_15] : memref<8x1xf32, #tpu.memory_space<vmem>>, vector<8x1xf32>
    %20 = vector.broadcast %19 : vector<8x1xf32> to vector<8x128xf32>
    %21 = arith.addf %18, %20 : vector<8x128xf32>
    %c0_16 = arith.constant 0 : index
    %c0_17 = arith.constant 0 : index
    %22 = vector.load %arg8[%c0_16, %c0_17] : memref<8x128xf32, #tpu.memory_space<vmem>>, vector<8x128xf32>
    tpu.vector_store %arg8[%c0_16, %c0_17], %21 {strides = array<i32>} : memref<8x128xf32, #tpu.memory_space<vmem>>, vector<8x128xf32>,
    return
  }
  func.func @transform_0(%arg0: i32) -> (i32, i32) {
    %c0_i32 = arith.constant 0 : i32
    %c0_i32_0 = arith.constant 0 : i32
    return %c0_i32, %arg0 : i32, i32
  }
  func.func @transform_1(%arg0: i32) -> (i32, i32) {
    %c0_i32 = arith.constant 0 : i32
    %c0_i32_0 = arith.constant 0 : i32
    %c0_i32_1 = arith.constant 0 : i32
    return %c0_i32, %c0_i32_0 : i32, i32
  }
  func.func @transform_2(%arg0: i32) -> (i32, i32) {
    %c0_i32 = arith.constant 0 : i32
    %c0_i32_0 = arith.constant 0 : i32
    %c0_i32_1 = arith.constant 0 : i32
    return %c0_i32, %c0_i32_0 : i32, i32
  }
  func.func @transform_3(%arg0: i32) -> (i32, i32) {
    %c0_i32 = arith.constant 0 : i32
    %c0_i32_0 = arith.constant 0 : i32
    %c0_i32_1 = arith.constant 0 : i32
    return %c0_i32, %c0_i32_0 : i32, i32
  }
  func.func @transform_4(%arg0: i32) -> (i32, i32) {
    %c0_i32 = arith.constant 0 : i32
    %c0_i32_0 = arith.constant 0 : i32
    %c0_i32_1 = arith.constant 0 : i32
    return %c0_i32, %c0_i32_0 : i32, i32
  }
  func.func @transform_5(%arg0: i32) -> (i32, i32) {
    %c0_i32 = arith.constant 0 : i32
    %c0_i32_0 = arith.constant 0 : i32
    %c0_i32_1 = arith.constant 0 : i32
    return %c0_i32, %c0_i32_0 : i32, i32
  }
  func.func @transform_6(%arg0: i32) -> (i32, i32) {
    %c0_i32 = arith.constant 0 : i32
    %c0_i32_0 = arith.constant 0 : i32
    %c0_i32_1 = arith.constant 0 : i32
    return %c0_i32, %c0_i32_0 : i32, i32
  }
  func.func @transform_7(%arg0: i32) -> (i32, i32) {
    %c0_i32 = arith.constant 0 : i32
    %c0_i32_0 = arith.constant 0 : i32
    return %c0_i32, %arg0 : i32, i32
  }
}

</mosaic_0001>

<llo_original>
// kernel: tpu_custom_call.1
$region0: #{tpu_custom_call.1}
  #allocation0 [shape = 'u32[]', space=smem, size = 0x4, offset = 0x4, fixed_abs, tag = 'smem constant byte address 0x4 - core index']
  #allocation1 [shape = 'u32[144,128]{1,0:T(1,128)}', space=vmem, size = 0x12000, scoped, tag = 'internal scratch']
  %s0 = inlined_call_operand.vmem [shape: f32[1,128], index: 0, kind: input, shape index: {}]
  %s1 = inlined_call_operand.vmem [shape: f32[64,1], index: 1, kind: input, shape index: {}]
  %s2 = inlined_call_operand.vmem [shape: f32[64,1], index: 2, kind: input, shape index: {}]
  %s3 = inlined_call_operand.vmem [shape: f32[64,64], index: 3, kind: input, shape index: {}]
  %s4 = inlined_call_operand.vmem [shape: f32[64,1], index: 4, kind: input, shape index: {}]
  %s5 = inlined_call_operand.vmem [shape: f32[8,64], index: 5, kind: input, shape index: {}]
  %s6 = inlined_call_operand.vmem [shape: f32[8,1], index: 6, kind: input, shape index: {}]
  %s7 = inlined_call_operand.hbm [shape: f32[8,128], index: 7, kind: output, shape index: {}]
  %s8 = sld [smem:[#allocation0]]
  $region38: #{tpu_custom_call.1} parent=0
    _
  %s10 = ssub.s32 1, %s8
  %s11 = scalar_select 0, %s10, %s8
  $region1: #{tpu_custom_call.1} parent=0
    #allocation2 [shape = 'u8[4096]{0}', space=vmem, size = 0x1000, scoped, tag = 'output window, operand 0, single buffered']
    #allocation3 [shape = 's32[1]{0}', space=sflag, size = 0x4, scoped, tag = 'scoped memory for tpu_custom_call.1']
    %12 = vsyncpa [#allocation3], 0
    // Predicated region
    $region2: #{tpu_custom_call.1} parent=1 // pred_check
      _
    $region3: #{tpu_custom_call.1} parent=1 // pred_check_branch
      %14 = sbr.rel (0) target = $region5
    $region4: #{tpu_custom_call.1} parent=1 // pred_region
      _
    $region5: #{tpu_custom_call.1} parent=1 // pred_fallthru
      _
    // Predicated region
    $region6: #{tpu_custom_call.1} parent=1 // pred_check
      _
    $region7: #{tpu_custom_call.1} parent=1 // pred_check_branch
      %16 = sbr.rel (0) target = $region9
    $region8: #{tpu_custom_call.1} parent=1 // pred_region
      _
    $region9: #{tpu_custom_call.1} parent=1 // pred_fallthru
      _
    // Predicated region
    $region10: #{tpu_custom_call.1} parent=1 // pred_check
      _
    $region11: #{tpu_custom_call.1} parent=1 // pred_check_branch
      %18 = sbr.rel (0) target = $region13
    $region12: #{tpu_custom_call.1} parent=1 // pred_region
      _
    $region13: #{tpu_custom_call.1} parent=1 // pred_fallthru
      _
    // Predicated region
    $region14: #{tpu_custom_call.1} parent=1 // pred_check
      _
    $region15: #{tpu_custom_call.1} parent=1 // pred_check_branch
      %20 = sbr.rel (0) target = $region17
    $region16: #{tpu_custom_call.1} parent=1 // pred_region
      _
    $region17: #{tpu_custom_call.1} parent=1 // pred_fallthru
      _
    // Predicated region
    $region18: #{tpu_custom_call.1} parent=1 // pred_check
      _
    $region19: #{tpu_custom_call.1} parent=1 // pred_check_branch
      %22 = sbr.rel (0) target = $region21
    $region20: #{tpu_custom_call.1} parent=1 // pred_region
      _
    $region21: #{tpu_custom_call.1} parent=1 // pred_fallthru
      _
    // Predicated region
    $region22: #{tpu_custom_call.1} parent=1 // pred_check
      _
    $region23: #{tpu_custom_call.1} parent=1 // pred_check_branch
      %24 = sbr.rel (0) target = $region25
    $region24: #{tpu_custom_call.1} parent=1 // pred_region
      _
    $region25: #{tpu_custom_call.1} parent=1 // pred_fallthru
      _
    // Predicated region
    $region26: #{tpu_custom_call.1} parent=1 // pred_check
      _
    $region27: #{tpu_custom_call.1} parent=1 // pred_check_branch
      %26 = sbr.rel (0) target = $region29
    $region28: #{tpu_custom_call.1} parent=1 // pred_region
      _
    $region29: #{tpu_custom_call.1} parent=1 // pred_fallthru
      _
    %v27 = vld [vmem:[%s0] sm:$0x1]
    %v28 = vld [vmem:[%s1] sm:$0xff]
    %v29 = vld [vmem:[%s1 + $0x8] sm:$0xff]
    %v30 = vld [vmem:[%s1 + $0x10] sm:$0xff]
    %v31 = vld [vmem:[%s1 + $0x18] sm:$0xff]
    %v32 = vld [vmem:[%s1 + $0x20] sm:$0xff]
    %v33 = vld [vmem:[%s1 + $0x28] sm:$0xff]
    %v34 = vld [vmem:[%s1 + $0x30] sm:$0xff]
    %v35 = vld [vmem:[%s1 + $0x38] sm:$0xff]
    %37 = vset.pattern.permute.xlu0 0
    %38 = vperm.xlu0 %37, %v28
    %v39 = vpop.permute.xlu0 %38
    %42 = vset.pattern.permute.xlu0 0
    %43 = vperm.xlu0 %42, %v29
    %v44 = vpop.permute.xlu0 %43
    %47 = vset.pattern.permute.xlu0 0
    %48 = vperm.xlu0 %47, %v30
    %v49 = vpop.permute.xlu0 %48
    %52 = vset.pattern.permute.xlu0 0
    %53 = vperm.xlu0 %52, %v31
    %v54 = vpop.permute.xlu0 %53
    %57 = vset.pattern.permute.xlu0 0
    %58 = vperm.xlu0 %57, %v32
    %v59 = vpop.permute.xlu0 %58
    %62 = vset.pattern.permute.xlu0 0
    %63 = vperm.xlu0 %62, %v33
    %v64 = vpop.permute.xlu0 %63
    %67 = vset.pattern.permute.xlu0 0
    %68 = vperm.xlu0 %67, %v34
    %v69 = vpop.permute.xlu0 %68
    %72 = vset.pattern.permute.xlu0 0
    %73 = vperm.xlu0 %72, %v35
    %v74 = vpop.permute.xlu0 %73
    %v77 = vlaneseq
    %v78 = vshrl.u32 %v77, 7
    %v79 = vsub.s32 0, %v78
    %v80 = vrot.slane %v27, %v79
    %v82 = vmul.f32 %v39, %v80
    %v83 = vmul.f32 %v44, %v80
    %v84 = vmul.f32 %v49, %v80
    %v85 = vmul.f32 %v54, %v80
    %v86 = vmul.f32 %v59, %v80
    %v87 = vmul.f32 %v64, %v80
    %v88 = vmul.f32 %v69, %v80
    %v89 = vmul.f32 %v74, %v80
    %v90 = vld [vmem:[%s2] sm:$0xff]
    %v91 = vld [vmem:[%s2 + $0x8] sm:$0xff]
    %v92 = vld [vmem:[%s2 + $0x10] sm:$0xff]
    %v93 = vld [vmem:[%s2 + $0x18] sm:$0xff]
    %v94 = vld [vmem:[%s2 + $0x20] sm:$0xff]
    %v95 = vld [vmem:[%s2 + $0x28] sm:$0xff]
    %v96 = vld [vmem:[%s2 + $0x30] sm:$0xff]
    %v97 = vld [vmem:[%s2 + $0x38] sm:$0xff]
    %99 = vset.pattern.permute.xlu0 0
    %100 = vperm.xlu0 %99, %v90
    %v101 = vpop.permute.xlu0 %100
    %104 = vset.pattern.permute.xlu0 0
    %105 = vperm.xlu0 %104, %v91
    %v106 = vpop.permute.xlu0 %105
    %109 = vset.pattern.permute.xlu0 0
    %110 = vperm.xlu0 %109, %v92
    %v111 = vpop.permute.xlu0 %110
    %114 = vset.pattern.permute.xlu0 0
    %115 = vperm.xlu0 %114, %v93
    %v116 = vpop.permute.xlu0 %115
    %119 = vset.pattern.permute.xlu0 0
    %120 = vperm.xlu0 %119, %v94
    %v121 = vpop.permute.xlu0 %120
    %124 = vset.pattern.permute.xlu0 0
    %125 = vperm.xlu0 %124, %v95
    %v126 = vpop.permute.xlu0 %125
    %129 = vset.pattern.permute.xlu0 0
    %130 = vperm.xlu0 %129, %v96
    %v131 = vpop.permute.xlu0 %130
    %134 = vset.pattern.permute.xlu0 0
    %135 = vperm.xlu0 %134, %v97
    %v136 = vpop.permute.xlu0 %135
    %v138 = vadd.f32 %v82, %v101
    %v139 = vadd.f32 %v83, %v106
    %v140 = vadd.f32 %v84, %v111
    %v141 = vadd.f32 %v85, %v116
    %v142 = vadd.f32 %v86, %v121
    %v143 = vadd.f32 %v87, %v126
    %v144 = vadd.f32 %v88, %v131
    %v145 = vadd.f32 %v89, %v136
    %v146 = vmax.f32 %v138, 0.0
    %v147 = vmax.f32 %v139, 0.0
    %v148 = vmax.f32 %v140, 0.0
    %v149 = vmax.f32 %v141, 0.0
    %v150 = vmax.f32 %v142, 0.0
    %v151 = vmax.f32 %v143, 0.0
    %v152 = vmax.f32 %v144, 0.0
    %v153 = vmax.f32 %v145, 0.0
    %v154 = vld [vmem:[%s3] sm:$0xff]
    %v155 = vld [vmem:[%s3 + $0x8] sm:$0xff]
    %v156 = vld [vmem:[%s3 + $0x10] sm:$0xff]
    %v157 = vld [vmem:[%s3 + $0x18] sm:$0xff]
    %v158 = vld [vmem:[%s3 + $0x20] sm:$0xff]
    %v159 = vld [vmem:[%s3 + $0x28] sm:$0xff]
    %v160 = vld [vmem:[%s3 + $0x30] sm:$0xff]
    %v161 = vld [vmem:[%s3 + $0x38] sm:$0xff]
    %v162 = vld [vmem:[%s4] sm:$0xff]
    %v163 = vld [vmem:[%s4 + $0x8] sm:$0xff]
    %v164 = vld [vmem:[%s4 + $0x10] sm:$0xff]
    %v165 = vld [vmem:[%s4 + $0x18] sm:$0xff]
    %v166 = vld [vmem:[%s4 + $0x20] sm:$0xff]
    %v167 = vld [vmem:[%s4 + $0x28] sm:$0xff]
    %v168 = vld [vmem:[%s4 + $0x30] sm:$0xff]
    %v169 = vld [vmem:[%s4 + $0x38] sm:$0xff]
    %171 = vset.pattern.permute.xlu0 0
    %172 = vperm.xlu0 %171, %v162
    %v173 = vpop.permute.xlu0 %172
    %176 = vset.pattern.permute.xlu0 0
    %177 = vperm.xlu0 %176, %v163
    %v178 = vpop.permute.xlu0 %177
    %181 = vset.pattern.permute.xlu0 0
    %182 = vperm.xlu0 %181, %v164
    %v183 = vpop.permute.xlu0 %182
    %186 = vset.pattern.permute.xlu0 0
    %187 = vperm.xlu0 %186, %v165
    %v188 = vpop.permute.xlu0 %187
    %191 = vset.pattern.permute.xlu0 0
    %192 = vperm.xlu0 %191, %v166
    %v193 = vpop.permute.xlu0 %192
    %196 = vset.pattern.permute.xlu0 0
    %197 = vperm.xlu0 %196, %v167
    %v198 = vpop.permute.xlu0 %197
    %201 = vset.pattern.permute.xlu0 0
    %202 = vperm.xlu0 %201, %v168
    %v203 = vpop.permute.xlu0 %202
    %206 = vset.pattern.permute.xlu0 0
    %207 = vperm.xlu0 %206, %v169
    %v208 = vpop.permute.xlu0 %207
    %vm210 = vcmask 523264
    %v212 = vsel %vm210, %v154, 0
    %v215 = vsel %vm210, %v155, 0
    %v218 = vsel %vm210, %v156, 0
    %v221 = vsel %vm210, %v157, 0
    %v224 = vsel %vm210, %v158, 0
    %v227 = vsel %vm210, %v159, 0
    %v230 = vsel %vm210, %v160, 0
    %v233 = vsel %vm210, %v161, 0
    %235 = vmatprep.subr.mxu0 0.0
    %236 = vmatpush1.msra.mxu0 0.0
    %237 = vmatprep.subr.mxu0 0.0
    %238 = vmatpush1.msra.mxu0 0.0
    %239 = vmatprep.subr.mxu0 0.0
    %240 = vmatpush1.msra.mxu0 0.0
    %241 = vmatprep.subr.mxu0 0.0
    %242 = vmatpush1.msra.mxu0 0.0
    %243 = vmatprep.subr.mxu0 0.0
    %244 = vmatpush1.msra.mxu0 0.0
    %245 = vmatprep.subr.mxu0 0.0
    %246 = vmatpush1.msra.mxu0 0.0
    %247 = vmatprep.subr.mxu0 0.0
    %248 = vmatpush1.msra.mxu0 0.0
    %249 = vmatprep.subr.mxu0 0.0
    %250 = vmatpush1.msra.mxu0 0.0
    %251 = vmatprep.subr.mxu0 0.0
    %252 = vmatpush1.msra.mxu0 %v153
    %253 = vmatprep.subr.mxu0 0.0
    %254 = vmatpush1.msra.mxu0 %v152
    %255 = vmatprep.subr.mxu0 0.0
    %256 = vmatpush1.msra.mxu0 %v151
    %257 = vmatprep.subr.mxu0 0.0
    %258 = vmatpush1.msra.mxu0 %v150
    %259 = vmatprep.subr.mxu0 0.0
    %260 = vmatpush1.msra.mxu0 %v149
    %261 = vmatprep.subr.mxu0 0.0
    %262 = vmatpush1.msra.mxu0 %v148
    %263 = vmatprep.subr.mxu0 0.0
    %264 = vmatpush1.msra.mxu0 %v147
    %265 = vmatprep.subr.mxu0 0.0
    %266 = vmatpush1.msra.mxu0 %v146
    %267 = vmatprep.subr.mxu0 0.0
    %268 = vmatpush2.msra.mxu0 0.0
    %269 = vmatprep.subr.mxu0 0.0
    %270 = vmatpush2.msra.mxu0 0.0
    %271 = vmatprep.subr.mxu0 0.0
    %272 = vmatpush2.msra.mxu0 0.0
    %273 = vmatprep.subr.mxu0 0.0
    %274 = vmatpush2.msra.mxu0 0.0
    %275 = vmatprep.subr.mxu0 0.0
    %276 = vmatpush2.msra.mxu0 0.0
    %277 = vmatprep.subr.mxu0 0.0
    %278 = vmatpush2.msra.mxu0 0.0
    %279 = vmatprep.subr.mxu0 0.0
    %280 = vmatpush2.msra.mxu0 0.0
    %281 = vmatprep.subr.mxu0 0.0
    %282 = vmatpush2.msra.mxu0 0.0
    %283 = vmatprep.subr.mxu0 0.0
    %284 = vmatpush2.msra.mxu0 0.0
    %285 = vmatprep.subr.mxu0 0.0
    %286 = vmatpush2.msra.mxu0 0.0
    %287 = vmatprep.subr.mxu0 0.0
    %288 = vmatpush2.msra.mxu0 0.0
    %289 = vmatprep.subr.mxu0 0.0
    %290 = vmatpush2.msra.mxu0 0.0
    %291 = vmatprep.subr.mxu0 0.0
    %292 = vmatpush2.msra.mxu0 0.0
    %293 = vmatprep.subr.mxu0 0.0
    %294 = vmatpush2.msra.mxu0 0.0
    %295 = vmatprep.subr.mxu0 0.0
    %296 = vmatpush2.msra.mxu0 0.0
    %297 = vmatprep.subr.mxu0 0.0
    %298 = vmatpush2.msra.mxu0 0.0
    %299 = vmatprep.mubr.f32.mxu0 0.0
    %300 = vmatmul.mubr.f32.gmra.mxu0 %v212
    %v301 = vpop.f32.mrf.mxu0
    %v302 = vadd.f32 %v173, %v301
    %v303 = vpop.f32.mrf.mxu0
    %304 = vmatprep.mubr.f32.mxu0 0.0
    %305 = vmatmul.mubr.f32.gmra.mxu0 %v215
    %v306 = vpop.f32.mrf.mxu0
    %v307 = vadd.f32 %v178, %v306
    %v308 = vpop.f32.mrf.mxu0
    %309 = vmatprep.mubr.f32.mxu0 0.0
    %310 = vmatmul.mubr.f32.gmra.mxu0 %v218
    %v311 = vpop.f32.mrf.mxu0
    %v312 = vadd.f32 %v183, %v311
    %v313 = vpop.f32.mrf.mxu0
    %314 = vmatprep.mubr.f32.mxu0 0.0
    %315 = vmatmul.mubr.f32.gmra.mxu0 %v221
    %v316 = vpop.f32.mrf.mxu0
    %v317 = vadd.f32 %v188, %v316
    %v318 = vpop.f32.mrf.mxu0
    %319 = vmatprep.mubr.f32.mxu0 0.0
    %320 = vmatmul.mubr.f32.gmra.mxu0 %v224
    %v321 = vpop.f32.mrf.mxu0
    %v322 = vadd.f32 %v193, %v321
    %v323 = vpop.f32.mrf.mxu0
    %324 = vmatprep.mubr.f32.mxu0 0.0
    %325 = vmatmul.mubr.f32.gmra.mxu0 %v227
    %v326 = vpop.f32.mrf.mxu0
    %v327 = vadd.f32 %v198, %v326
    %v328 = vpop.f32.mrf.mxu0
    %329 = vmatprep.mubr.f32.mxu0 0.0
    %330 = vmatmul.mubr.f32.gmra.mxu0 %v230
    %v331 = vpop.f32.mrf.mxu0
    %v332 = vadd.f32 %v203, %v331
    %v333 = vpop.f32.mrf.mxu0
    %334 = vmatprep.mubr.f32.mxu0 0.0
    %335 = vmatmul.mubr.f32.gmra.mxu0 %v233
    %v336 = vpop.f32.mrf.mxu0
    %v337 = vadd.f32 %v208, %v336
    %v338 = vpop.f32.mrf.mxu0
    %339 = vdwg.mxu0
    %v340 = vmax.f32 %v302, 0.0
    %v341 = vmax.f32 %v307, 0.0
    %v342 = vmax.f32 %v312, 0.0
    %v343 = vmax.f32 %v317, 0.0
    %v344 = vmax.f32 %v322, 0.0
    %v345 = vmax.f32 %v327, 0.0
    %v346 = vmax.f32 %v332, 0.0
    %v347 = vmax.f32 %v337, 0.0
    %v348 = vld [vmem:[%s5] sm:$0xff]
    %v349 = vld [vmem:[%s6] sm:$0xff]
    %351 = vset.pattern.permute.xlu0 0
    %352 = vperm.xlu0 %351, %v349
    %v353 = vpop.permute.xlu0 %352
    %v356 = vsel %vm210, %v348, 0
    %358 = vmatprep.subr.mxu0 0.0
    %359 = vmatpush1.msra.mxu0 0.0
    %360 = vmatprep.subr.mxu0 0.0
    %361 = vmatpush1.msra.mxu0 0.0
    %362 = vmatprep.subr.mxu0 0.0
    %363 = vmatpush1.msra.mxu0 0.0
    %364 = vmatprep.subr.mxu0 0.0
    %365 = vmatpush1.msra.mxu0 0.0
    %366 = vmatprep.subr.mxu0 0.0
    %367 = vmatpush1.msra.mxu0 0.0
    %368 = vmatprep.subr.mxu0 0.0
    %369 = vmatpush1.msra.mxu0 0.0
    %370 = vmatprep.subr.mxu0 0.0
    %371 = vmatpush1.msra.mxu0 0.0
    %372 = vmatprep.subr.mxu0 0.0
    %373 = vmatpush1.msra.mxu0 0.0
    %374 = vmatprep.subr.mxu0 0.0
    %375 = vmatpush1.msra.mxu0 %v347
    %376 = vmatprep.subr.mxu0 0.0
    %377 = vmatpush1.msra.mxu0 %v346
    %378 = vmatprep.subr.mxu0 0.0
    %379 = vmatpush1.msra.mxu0 %v345
    %380 = vmatprep.subr.mxu0 0.0
    %381 = vmatpush1.msra.mxu0 %v344
    %382 = vmatprep.subr.mxu0 0.0
    %383 = vmatpush1.msra.mxu0 %v343
    %384 = vmatprep.subr.mxu0 0.0
    %385 = vmatpush1.msra.mxu0 %v342
    %386 = vmatprep.subr.mxu0 0.0
    %387 = vmatpush1.msra.mxu0 %v341
    %388 = vmatprep.subr.mxu0 0.0
    %389 = vmatpush1.msra.mxu0 %v340
    %390 = vmatprep.subr.mxu0 0.0
    %391 = vmatpush2.msra.mxu0 0.0
    %392 = vmatprep.subr.mxu0 0.0
    %393 = vmatpush2.msra.mxu0 0.0
    %394 = vmatprep.subr.mxu0 0.0
    %395 = vmatpush2.msra.mxu0 0.0
    %396 = vmatprep.subr.mxu0 0.0
    %397 = vmatpush2.msra.mxu0 0.0
    %398 = vmatprep.subr.mxu0 0.0
    %399 = vmatpush2.msra.mxu0 0.0
    %400 = vmatprep.subr.mxu0 0.0
    %401 = vmatpush2.msra.mxu0 0.0
    %402 = vmatprep.subr.mxu0 0.0
    %403 = vmatpush2.msra.mxu0 0.0
    %404 = vmatprep.subr.mxu0 0.0
    %405 = vmatpush2.msra.mxu0 0.0
    %406 = vmatprep.subr.mxu0 0.0
    %407 = vmatpush2.msra.mxu0 0.0
    %408 = vmatprep.subr.mxu0 0.0
    %409 = vmatpush2.msra.mxu0 0.0
    %410 = vmatprep.subr.mxu0 0.0
    %411 = vmatpush2.msra.mxu0 0.0
    %412 = vmatprep.subr.mxu0 0.0
    %413 = vmatpush2.msra.mxu0 0.0
    %414 = vmatprep.subr.mxu0 0.0
    %415 = vmatpush2.msra.mxu0 0.0
    %416 = vmatprep.subr.mxu0 0.0
    %417 = vmatpush2.msra.mxu0 0.0
    %418 = vmatprep.subr.mxu0 0.0
    %419 = vmatpush2.msra.mxu0 0.0
    %420 = vmatprep.subr.mxu0 0.0
    %421 = vmatpush2.msra.mxu0 0.0
    %422 = vmatprep.mubr.f32.mxu0 0.0
    %423 = vmatmul.mubr.f32.gmra.mxu0 %v356
    %v424 = vpop.f32.mrf.mxu0
    %v425 = vadd.f32 %v353, %v424
    %v426 = vpop.f32.mrf.mxu0
    %427 = vdwg.mxu0
    %428 = vst [vmem:[#allocation2] sm:$0xff] %v425
    // Predicated region
    $region30: #{tpu_custom_call.1} parent=1 // pred_check
      _
    $region31: #{tpu_custom_call.1} parent=1 // pred_check_branch
      %430 = sbr.rel (0) target = $region33
    $region32: #{tpu_custom_call.1} parent=1 // pred_region
      %s432 = ssub.s32 128, 128
      %433 = vsyncadd [#allocation3], %s432
      %s435 = sshll.u32 [#allocation2], 4
      %s436 = int_to_ptr.vmem [resolvable:$true] %s435
      %438 = dma.vmem_to_hbm [thread:$0]  %s436, 128, %s7, [#allocation3]
    $region33: #{tpu_custom_call.1} parent=1 // pred_fallthru
      _
    // Predicated region
    $region34: #{tpu_custom_call.1} parent=1 // pred_check
      _
    $region35: #{tpu_custom_call.1} parent=1 // pred_check_branch
      %440 = sbr.rel (0) target = $region37
    $region36: #{tpu_custom_call.1} parent=1 // pred_region
      %441 = dma.done [#allocation3], 128
    $region37: #{tpu_custom_call.1} parent=1 // pred_fallthru
      _
    %442 = vsyncpa [#allocation3], 1

</llo_original>
